<compile_context>
chip_gen: v7x
topology: tpu7x:2x2x1
jax: 0.10.0
libtpu: 0.0.40
codegen_flags: <defaults>
</compile_context>

<pallas_src>
import jax
import jax.numpy as jnp
from jax import lax
from jax.experimental import pallas as pl
from jax.experimental.pallas import tpu as pltpu


def _rnn_recur_kernel(pre_ref, h0_ref, wh_ref, out_ref, h_scratch):
    """T_BLOCK recurrent steps:  h = relu(h @ Wh^T + pre[t])."""
    @pl.when(pl.program_id(0) == 0)
    def _():
        h_scratch[...] = h0_ref[0]            # (B, H) initial hidden state

    t_block = pre_ref.shape[0]
    wh = wh_ref[...]                          # (H, H), VMEM-resident

    def step(i, h):
        acc = jnp.dot(h.astype(wh.dtype), wh,
                      preferred_element_type=jnp.float32)   # MXU
        h_new = jnp.maximum(acc + pre_ref[i], 0.0)           # VPU, f32
        out_ref[i] = h_new
        return h_new

    h_final = lax.fori_loop(0, t_block, step, h_scratch[...], unroll=True)
    h_scratch[...] = h_final                  # carry across grid blocks


def w_rnn_gate_noise_pallas(x, h0, weight, bias, noise, *, t_block=8,
                            compute_dtype=jnp.float32):
    """
    x:      (S, B, I)   float32
    h0:     (1, B, H)   float32
    weight: (H, I + H)  float32   (nn.Linear weight)
    bias:   (H,)        float32   (nn.Linear bias)
    noise:  (S, B, I+H) float32   (already scaled by noise_scale)
    returns (out (S, B, H), hidden (1, B, H))
    """
    S, B, I = x.shape
    H = h0.shape[-1]

    # ---- glue: hoist the input projection out of the recurrence ----------
    # pre[t] = (x[t] + n_x[t]) @ Wx^T + n_h[t] @ Wh^T + b   computed as one
    # K=(I+H) matmul over the noisy "combined" vector (hidden contribution
    # removed -> handled recurrently in the kernel).
    xn = jnp.concatenate([x + noise[..., :I], noise[..., I:]], axis=-1)
    pre = jnp.einsum('sbk,hk->sbh', xn, weight,
                     preferred_element_type=jnp.float32) + bias     # (S,B,H)

    # Hidden-to-hidden weight, transposed for (B,H) @ (H,H); optional bf16.
    wh_t = jnp.transpose(weight[:, I:]).astype(compute_dtype)       # (H, H)

    # ---- pad S so the grid evenly covers it (extra steps are discarded) --
    t_block = max(1, min(t_block, S))
    n_blocks = pl.cdiv(S, t_block)
    s_pad = n_blocks * t_block
    if s_pad != S:
        pre = jnp.concatenate(
            [pre, jnp.zeros((s_pad - S, B, H), pre.dtype)], axis=0)

    out_full = pl.pallas_call(
        _rnn_recur_kernel,
        out_shape=jax.ShapeDtypeStruct((s_pad, B, H), jnp.float32),
        grid_spec=pltpu.PrefetchScalarGridSpec(
            num_scalar_prefetch=0,
            grid=(n_blocks,),
            in_specs=[
                pl.BlockSpec((t_block, B, H), lambda t: (t, 0, 0)),  # pre slab
                pl.BlockSpec((1, B, H), lambda t: (0, 0, 0)),        # h0
                pl.BlockSpec((H, H), lambda t: (0, 0)),              # Wh^T
            ],
            out_specs=pl.BlockSpec((t_block, B, H), lambda t: (t, 0, 0)),
            scratch_shapes=[pltpu.VMEM((B, H), jnp.float32)],        # h carry
        ),
        compiler_params=pltpu.CompilerParams(
            dimension_semantics=("arbitrary",),   # true recurrence over time
        ),
    )(pre, h0, wh_t)

    out = out_full[:S]                           # (S, B, H)
    hidden = out_full[S - 1:S]                   # (1, B, H) final hidden
    return out, hidden


def w_rnn_gate_noise_ref(x, h0, weight, bias, noise):
    """Plain-JAX reference mirroring the PyTorch forward exactly."""
    def step(h, inputs):
        xt, nt = inputs                          # (B, I), (B, I+H)
        combined = jnp.concatenate([xt, h[0]], axis=-1) + nt
        h_new = jax.nn.relu(combined @ weight.T + bias)[None]
        return h_new, h_new[0]
    h_final, outs = lax.scan(step, h0, (x, noise))
    return outs, h_final


if __name__ == "__main__":
    S, B, I, H = 8, 4, 16, 32
    noise_scale = 0.1

    key = jax.random.PRNGKey(0)
    kx, kh, kw, kb, kn = jax.random.split(key, 5)

    x = jax.random.normal(kx, (S, B, I), dtype=jnp.float32)
    h0 = jax.random.normal(kh, (1, B, H), dtype=jnp.float32)

    # Deterministic nn.Linear-style init: U(-1/sqrt(fan_in), 1/sqrt(fan_in))
    fan_in = I + H
    bound = 1.0 / (fan_in ** 0.5)
    weight = jax.random.uniform(kw, (H, I + H), jnp.float32, -bound, bound)
    bias = jax.random.uniform(kb, (H,), jnp.float32, -bound, bound)

    # Gaussian noise, one draw per time step (matches get_noise per iteration).
    noise = noise_scale * jax.random.normal(kn, (S, B, I + H), dtype=jnp.float32)

    out_ref, hidden_ref = w_rnn_gate_noise_ref(x, h0, weight, bias, noise)

    # fp32 path, single grid block (t_block = S).
    out, hidden = w_rnn_gate_noise_pallas(x, h0, weight, bias, noise, t_block=8)
    jax.block_until_ready((out, hidden))
    assert out.shape == (S, B, H) and hidden.shape == (1, B, H)
    assert jnp.allclose(out, out_ref, atol=1e-4, rtol=1e-4)
    assert jnp.allclose(hidden, hidden_ref, atol=1e-4, rtol=1e-4)

    # Multi-block + padding path (S not a multiple of t_block).
    out2, hidden2 = w_rnn_gate_noise_pallas(x, h0, weight, bias, noise, t_block=3)
    jax.block_until_ready((out2, hidden2))
    assert jnp.allclose(out2, out_ref, atol=1e-4, rtol=1e-4)
    assert jnp.allclose(hidden2, hidden_ref, atol=1e-4, rtol=1e-4)

    # bf16 MXU-operand path (v6e/v7x optimization); sanity-check only.
    out_bf, hidden_bf = w_rnn_gate_noise_pallas(
        x, h0, weight, bias, noise, t_block=4, compute_dtype=jnp.bfloat16)
    jax.block_until_ready((out_bf, hidden_bf))
    assert out_bf.shape == (S, B, H) and hidden_bf.shape == (1, B, H)
    assert bool(jnp.all(jnp.isfinite(out_bf)))

    print("KERNEL_OK")
</pallas_src>

<mosaic_0001>
module attributes {stable_mosaic.version = 11 : i64} {
  func.func @_rnn_recur_kernel(%arg0: i32, %arg1: memref<8x4x32xf32, #tpu.memory_space<vmem>>, %arg2: memref<1x4x32xf32, #tpu.memory_space<vmem>>, %arg3: memref<32x32xf32, #tpu.memory_space<vmem>>, %arg4: memref<8x4x32xf32, #tpu.memory_space<vmem>>, %arg5: memref<4x32xf32, #tpu.memory_space<vmem>>) attributes {dimension_semantics = [#tpu.dimension_semantics<arbitrary>], iteration_bounds = array<i64: 1>, scalar_prefetch = 0 : i64, scratch_operands = 1 : i64, tpu.core_type = #tpu.core_type<tc>, window_params = [{transform_indices = @transform_0, window_bounds = array<i64: 8, 4, 32>}, {pipeline_mode = #tpu.pipeline_mode<synchronous>, transform_indices = @transform_1, window_bounds = array<i64: 1, 4, 32>}, {pipeline_mode = #tpu.pipeline_mode<synchronous>, transform_indices = @transform_2, window_bounds = array<i64: 32, 32>}, {transform_indices = @transform_3, window_bounds = array<i64: 8, 4, 32>}]} {
    %c0_i32 = arith.constant 0 : i32
    %0 = arith.cmpi eq, %arg0, %c0_i32 : i32
    %1 = arith.extui %0 : i1 to i32
    %c0_i32_0 = arith.constant 0 : i32
    %2 = arith.cmpi ne, %1, %c0_i32_0 : i32
    scf.if %2 {
      %c0_54 = arith.constant 0 : index
      %c0_55 = arith.constant 0 : index
      %c0_56 = arith.constant 0 : index
      %94 = vector.load %arg2[%c0_54, %c0_55, %c0_56] : memref<1x4x32xf32, #tpu.memory_space<vmem>>, vector<1x4x32xf32>
      %95 = vector.shape_cast %94 : vector<1x4x32xf32> to vector<4x32xf32>
      %c0_57 = arith.constant 0 : index
      %c0_58 = arith.constant 0 : index
      %96 = vector.load %arg5[%c0_57, %c0_58] : memref<4x32xf32, #tpu.memory_space<vmem>>, vector<4x32xf32>
      tpu.vector_store %arg5[%c0_57, %c0_58], %95 {strides = array<i32>} : memref<4x32xf32, #tpu.memory_space<vmem>>, vector<4x32xf32>,
    } else {
    }
    %c0 = arith.constant 0 : index
    %c0_1 = arith.constant 0 : index
    %3 = vector.load %arg3[%c0, %c0_1] : memref<32x32xf32, #tpu.memory_space<vmem>>, vector<32x32xf32>
    %c0_2 = arith.constant 0 : index
    %c0_3 = arith.constant 0 : index
    %4 = vector.load %arg5[%c0_2, %c0_3] : memref<4x32xf32, #tpu.memory_space<vmem>>, vector<4x32xf32>
    %c0_i32_4 = arith.constant 0 : i32
    %cst = arith.constant dense<0.000000e+00> : vector<4x32xf32>
    %5 = tpu.matmul %4, %3, %cst {dimension_numbers = #tpu.dot_dimension_numbers<[1], [0], [0], [1], [0, 0, 1, 1], [], []>} : vector<4x32xf32>, vector<32x32xf32>, vector<4x32xf32> -> vector<4x32xf32>
    %6 = arith.index_cast %c0_i32_4 : i32 to index
    %c0_5 = arith.constant 0 : index
    %c0_6 = arith.constant 0 : index
    %7 = vector.load %arg1[%6, %c0_5, %c0_6] : memref<8x4x32xf32, #tpu.memory_space<vmem>>, vector<1x4x32xf32>
    %8 = vector.shape_cast %7 : vector<1x4x32xf32> to vector<4x32xf32>
    %9 = arith.addf %5, %8 : vector<4x32xf32>
    %cst_7 = arith.constant 0.000000e+00 : f32
    %10 = vector.broadcast %cst_7 : f32 to vector<4x32xf32>
    %11 = arith.maximumf %9, %10 : vector<4x32xf32>
    %12 = arith.index_cast %c0_i32_4 : i32 to index
    %c0_8 = arith.constant 0 : index
    %c0_9 = arith.constant 0 : index
    %13 = vector.load %arg4[%12, %c0_8, %c0_9] : memref<8x4x32xf32, #tpu.memory_space<vmem>>, vector<1x4x32xf32>
    %14 = vector.shape_cast %13 : vector<1x4x32xf32> to vector<4x32xf32>
    %15 = vector.shape_cast %11 : vector<4x32xf32> to vector<1x4x32xf32>
    tpu.vector_store %arg4[%12, %c0_8, %c0_9], %15 {strides = array<i32>} : memref<8x4x32xf32, #tpu.memory_space<vmem>>, vector<1x4x32xf32>,
    %c1_i32 = arith.constant 1 : i32
    %cst_10 = arith.constant dense<0.000000e+00> : vector<4x32xf32>
    %16 = tpu.matmul %11, %3, %cst_10 {dimension_numbers = #tpu.dot_dimension_numbers<[1], [0], [0], [1], [0, 0, 1, 1], [], []>} : vector<4x32xf32>, vector<32x32xf32>, vector<4x32xf32> -> vector<4x32xf32>
    %17 = arith.index_cast %c1_i32 : i32 to index
    %c0_11 = arith.constant 0 : index
    %c0_12 = arith.constant 0 : index
    %18 = vector.load %arg1[%17, %c0_11, %c0_12] : memref<8x4x32xf32, #tpu.memory_space<vmem>>, vector<1x4x32xf32>
    %19 = vector.shape_cast %18 : vector<1x4x32xf32> to vector<4x32xf32>
    %20 = arith.addf %16, %19 : vector<4x32xf32>
    %cst_13 = arith.constant 0.000000e+00 : f32
    %21 = vector.broadcast %cst_13 : f32 to vector<4x32xf32>
    %22 = arith.maximumf %20, %21 : vector<4x32xf32>
    %23 = arith.index_cast %c1_i32 : i32 to index
    %c0_14 = arith.constant 0 : index
    %c0_15 = arith.constant 0 : index
    %24 = vector.load %arg4[%23, %c0_14, %c0_15] : memref<8x4x32xf32, #tpu.memory_space<vmem>>, vector<1x4x32xf32>
    %25 = vector.shape_cast %24 : vector<1x4x32xf32> to vector<4x32xf32>
    %26 = vector.shape_cast %22 : vector<4x32xf32> to vector<1x4x32xf32>
    tpu.vector_store %arg4[%23, %c0_14, %c0_15], %26 {strides = array<i32>} : memref<8x4x32xf32, #tpu.memory_space<vmem>>, vector<1x4x32xf32>,
    %c2_i32 = arith.constant 2 : i32
    %cst_16 = arith.constant dense<0.000000e+00> : vector<4x32xf32>
    %27 = tpu.matmul %22, %3, %cst_16 {dimension_numbers = #tpu.dot_dimension_numbers<[1], [0], [0], [1], [0, 0, 1, 1], [], []>} : vector<4x32xf32>, vector<32x32xf32>, vector<4x32xf32> -> vector<4x32xf32>
    %28 = arith.index_cast %c2_i32 : i32 to index
    %c0_17 = arith.constant 0 : index
    %c0_18 = arith.constant 0 : index
    %29 = vector.load %arg1[%28, %c0_17, %c0_18] : memref<8x4x32xf32, #tpu.memory_space<vmem>>, vector<1x4x32xf32>
    %30 = vector.shape_cast %29 : vector<1x4x32xf32> to vector<4x32xf32>
    %31 = arith.addf %27, %30 : vector<4x32xf32>
    %cst_19 = arith.constant 0.000000e+00 : f32
    %32 = vector.broadcast %cst_19 : f32 to vector<4x32xf32>
    %33 = arith.maximumf %31, %32 : vector<4x32xf32>
    %34 = arith.index_cast %c2_i32 : i32 to index
    %c0_20 = arith.constant 0 : index
    %c0_21 = arith.constant 0 : index
    %35 = vector.load %arg4[%34, %c0_20, %c0_21] : memref<8x4x32xf32, #tpu.memory_space<vmem>>, vector<1x4x32xf32>
    %36 = vector.shape_cast %35 : vector<1x4x32xf32> to vector<4x32xf32>
    %37 = vector.shape_cast %33 : vector<4x32xf32> to vector<1x4x32xf32>
    tpu.vector_store %arg4[%34, %c0_20, %c0_21], %37 {strides = array<i32>} : memref<8x4x32xf32, #tpu.memory_space<vmem>>, vector<1x4x32xf32>,
    %c3_i32 = arith.constant 3 : i32
    %cst_22 = arith.constant dense<0.000000e+00> : vector<4x32xf32>
    %38 = tpu.matmul %33, %3, %cst_22 {dimension_numbers = #tpu.dot_dimension_numbers<[1], [0], [0], [1], [0, 0, 1, 1], [], []>} : vector<4x32xf32>, vector<32x32xf32>, vector<4x32xf32> -> vector<4x32xf32>
    %39 = arith.index_cast %c3_i32 : i32 to index
    %c0_23 = arith.constant 0 : index
    %c0_24 = arith.constant 0 : index
    %40 = vector.load %arg1[%39, %c0_23, %c0_24] : memref<8x4x32xf32, #tpu.memory_space<vmem>>, vector<1x4x32xf32>
    %41 = vector.shape_cast %40 : vector<1x4x32xf32> to vector<4x32xf32>
    %42 = arith.addf %38, %41 : vector<4x32xf32>
    %cst_25 = arith.constant 0.000000e+00 : f32
    %43 = vector.broadcast %cst_25 : f32 to vector<4x32xf32>
    %44 = arith.maximumf %42, %43 : vector<4x32xf32>
    %45 = arith.index_cast %c3_i32 : i32 to index
    %c0_26 = arith.constant 0 : index
    %c0_27 = arith.constant 0 : index
    %46 = vector.load %arg4[%45, %c0_26, %c0_27] : memref<8x4x32xf32, #tpu.memory_space<vmem>>, vector<1x4x32xf32>
    %47 = vector.shape_cast %46 : vector<1x4x32xf32> to vector<4x32xf32>
    %48 = vector.shape_cast %44 : vector<4x32xf32> to vector<1x4x32xf32>
    tpu.vector_store %arg4[%45, %c0_26, %c0_27], %48 {strides = array<i32>} : memref<8x4x32xf32, #tpu.memory_space<vmem>>, vector<1x4x32xf32>,
    %c4_i32 = arith.constant 4 : i32
    %cst_28 = arith.constant dense<0.000000e+00> : vector<4x32xf32>
    %49 = tpu.matmul %44, %3, %cst_28 {dimension_numbers = #tpu.dot_dimension_numbers<[1], [0], [0], [1], [0, 0, 1, 1], [], []>} : vector<4x32xf32>, vector<32x32xf32>, vector<4x32xf32> -> vector<4x32xf32>
    %50 = arith.index_cast %c4_i32 : i32 to index
    %c0_29 = arith.constant 0 : index
    %c0_30 = arith.constant 0 : index
    %51 = vector.load %arg1[%50, %c0_29, %c0_30] : memref<8x4x32xf32, #tpu.memory_space<vmem>>, vector<1x4x32xf32>
    %52 = vector.shape_cast %51 : vector<1x4x32xf32> to vector<4x32xf32>
    %53 = arith.addf %49, %52 : vector<4x32xf32>
    %cst_31 = arith.constant 0.000000e+00 : f32
    %54 = vector.broadcast %cst_31 : f32 to vector<4x32xf32>
    %55 = arith.maximumf %53, %54 : vector<4x32xf32>
    %56 = arith.index_cast %c4_i32 : i32 to index
    %c0_32 = arith.constant 0 : index
    %c0_33 = arith.constant 0 : index
    %57 = vector.load %arg4[%56, %c0_32, %c0_33] : memref<8x4x32xf32, #tpu.memory_space<vmem>>, vector<1x4x32xf32>
    %58 = vector.shape_cast %57 : vector<1x4x32xf32> to vector<4x32xf32>
    %59 = vector.shape_cast %55 : vector<4x32xf32> to vector<1x4x32xf32>
    tpu.vector_store %arg4[%56, %c0_32, %c0_33], %59 {strides = array<i32>} : memref<8x4x32xf32, #tpu.memory_space<vmem>>, vector<1x4x32xf32>,
    %c5_i32 = arith.constant 5 : i32
    %cst_34 = arith.constant dense<0.000000e+00> : vector<4x32xf32>
    %60 = tpu.matmul %55, %3, %cst_34 {dimension_numbers = #tpu.dot_dimension_numbers<[1], [0], [0], [1], [0, 0, 1, 1], [], []>} : vector<4x32xf32>, vector<32x32xf32>, vector<4x32xf32> -> vector<4x32xf32>
    %61 = arith.index_cast %c5_i32 : i32 to index
    %c0_35 = arith.constant 0 : index
    %c0_36 = arith.constant 0 : index
    %62 = vector.load %arg1[%61, %c0_35, %c0_36] : memref<8x4x32xf32, #tpu.memory_space<vmem>>, vector<1x4x32xf32>
    %63 = vector.shape_cast %62 : vector<1x4x32xf32> to vector<4x32xf32>
    %64 = arith.addf %60, %63 : vector<4x32xf32>
    %cst_37 = arith.constant 0.000000e+00 : f32
    %65 = vector.broadcast %cst_37 : f32 to vector<4x32xf32>
    %66 = arith.maximumf %64, %65 : vector<4x32xf32>
    %67 = arith.index_cast %c5_i32 : i32 to index
    %c0_38 = arith.constant 0 : index
    %c0_39 = arith.constant 0 : index
    %68 = vector.load %arg4[%67, %c0_38, %c0_39] : memref<8x4x32xf32, #tpu.memory_space<vmem>>, vector<1x4x32xf32>
    %69 = vector.shape_cast %68 : vector<1x4x32xf32> to vector<4x32xf32>
    %70 = vector.shape_cast %66 : vector<4x32xf32> to vector<1x4x32xf32>
    tpu.vector_store %arg4[%67, %c0_38, %c0_39], %70 {strides = array<i32>} : memref<8x4x32xf32, #tpu.memory_space<vmem>>, vector<1x4x32xf32>,
    %c6_i32 = arith.constant 6 : i32
    %cst_40 = arith.constant dense<0.000000e+00> : vector<4x32xf32>
    %71 = tpu.matmul %66, %3, %cst_40 {dimension_numbers = #tpu.dot_dimension_numbers<[1], [0], [0], [1], [0, 0, 1, 1], [], []>} : vector<4x32xf32>, vector<32x32xf32>, vector<4x32xf32> -> vector<4x32xf32>
    %72 = arith.index_cast %c6_i32 : i32 to index
    %c0_41 = arith.constant 0 : index
    %c0_42 = arith.constant 0 : index
    %73 = vector.load %arg1[%72, %c0_41, %c0_42] : memref<8x4x32xf32, #tpu.memory_space<vmem>>, vector<1x4x32xf32>
    %74 = vector.shape_cast %73 : vector<1x4x32xf32> to vector<4x32xf32>
    %75 = arith.addf %71, %74 : vector<4x32xf32>
    %cst_43 = arith.constant 0.000000e+00 : f32
    %76 = vector.broadcast %cst_43 : f32 to vector<4x32xf32>
    %77 = arith.maximumf %75, %76 : vector<4x32xf32>
    %78 = arith.index_cast %c6_i32 : i32 to index
    %c0_44 = arith.constant 0 : index
    %c0_45 = arith.constant 0 : index
    %79 = vector.load %arg4[%78, %c0_44, %c0_45] : memref<8x4x32xf32, #tpu.memory_space<vmem>>, vector<1x4x32xf32>
    %80 = vector.shape_cast %79 : vector<1x4x32xf32> to vector<4x32xf32>
    %81 = vector.shape_cast %77 : vector<4x32xf32> to vector<1x4x32xf32>
    tpu.vector_store %arg4[%78, %c0_44, %c0_45], %81 {strides = array<i32>} : memref<8x4x32xf32, #tpu.memory_space<vmem>>, vector<1x4x32xf32>,
    %c7_i32 = arith.constant 7 : i32
    %cst_46 = arith.constant dense<0.000000e+00> : vector<4x32xf32>
    %82 = tpu.matmul %77, %3, %cst_46 {dimension_numbers = #tpu.dot_dimension_numbers<[1], [0], [0], [1], [0, 0, 1, 1], [], []>} : vector<4x32xf32>, vector<32x32xf32>, vector<4x32xf32> -> vector<4x32xf32>
    %83 = arith.index_cast %c7_i32 : i32 to index
    %c0_47 = arith.constant 0 : index
    %c0_48 = arith.constant 0 : index
    %84 = vector.load %arg1[%83, %c0_47, %c0_48] : memref<8x4x32xf32, #tpu.memory_space<vmem>>, vector<1x4x32xf32>
    %85 = vector.shape_cast %84 : vector<1x4x32xf32> to vector<4x32xf32>
    %86 = arith.addf %82, %85 : vector<4x32xf32>
    %cst_49 = arith.constant 0.000000e+00 : f32
    %87 = vector.broadcast %cst_49 : f32 to vector<4x32xf32>
    %88 = arith.maximumf %86, %87 : vector<4x32xf32>
    %89 = arith.index_cast %c7_i32 : i32 to index
    %c0_50 = arith.constant 0 : index
    %c0_51 = arith.constant 0 : index
    %90 = vector.load %arg4[%89, %c0_50, %c0_51] : memref<8x4x32xf32, #tpu.memory_space<vmem>>, vector<1x4x32xf32>
    %91 = vector.shape_cast %90 : vector<1x4x32xf32> to vector<4x32xf32>
    %92 = vector.shape_cast %88 : vector<4x32xf32> to vector<1x4x32xf32>
    tpu.vector_store %arg4[%89, %c0_50, %c0_51], %92 {strides = array<i32>} : memref<8x4x32xf32, #tpu.memory_space<vmem>>, vector<1x4x32xf32>,
    %c8_i32 = arith.constant 8 : i32
    %c0_52 = arith.constant 0 : index
    %c0_53 = arith.constant 0 : index
    %93 = vector.load %arg5[%c0_52, %c0_53] : memref<4x32xf32, #tpu.memory_space<vmem>>, vector<4x32xf32>
    tpu.vector_store %arg5[%c0_52, %c0_53], %88 {strides = array<i32>} : memref<4x32xf32, #tpu.memory_space<vmem>>, vector<4x32xf32>,
    return
  }
  func.func @transform_0(%arg0: i32) -> (i32, i32, i32) {
    %c0_i32 = arith.constant 0 : i32
    %c0_i32_0 = arith.constant 0 : i32
    %c0_i32_1 = arith.constant 0 : i32
    return %arg0, %c0_i32, %c0_i32_0 : i32, i32, i32
  }
  func.func @transform_1(%arg0: i32) -> (i32, i32, i32) {
    %c0_i32 = arith.constant 0 : i32
    %c0_i32_0 = arith.constant 0 : i32
    %c0_i32_1 = arith.constant 0 : i32
    %c0_i32_2 = arith.constant 0 : i32
    return %c0_i32, %c0_i32_0, %c0_i32_1 : i32, i32, i32
  }
  func.func @transform_2(%arg0: i32) -> (i32, i32) {
    %c0_i32 = arith.constant 0 : i32
    %c0_i32_0 = arith.constant 0 : i32
    %c0_i32_1 = arith.constant 0 : i32
    return %c0_i32, %c0_i32_0 : i32, i32
  }
  func.func @transform_3(%arg0: i32) -> (i32, i32, i32) {
    %c0_i32 = arith.constant 0 : i32
    %c0_i32_0 = arith.constant 0 : i32
    %c0_i32_1 = arith.constant 0 : i32
    return %arg0, %c0_i32, %c0_i32_0 : i32, i32, i32
  }
}

</mosaic_0001>

<llo_original>
// kernel: tpu_custom_call.1
$region0: #{tpu_custom_call.1}
  #allocation0 [shape = 'u32[]', space=smem, size = 0x4, offset = 0x4, fixed_abs, tag = 'smem constant byte address 0x4 - core index']
  #allocation1 [shape = 'u32[144,128]{1,0:T(1,128)}', space=vmem, size = 0x12000, scoped, tag = 'internal scratch']
  #allocation2 [shape = 'f32[4,32]{1,0:T(4,128)}', space=vmem, size = 0x800, scoped, tag = 'scratch operand']
  %s0 = inlined_call_operand.hbm [shape: f32[8,4,32], index: 0, kind: input, shape index: {}]
  %s1 = inlined_call_operand.hbm [shape: f32[1,4,32], index: 1, kind: input, shape index: {}]
  %s2 = inlined_call_operand.hbm [shape: f32[32,32], index: 2, kind: input, shape index: {}]
  %s3 = inlined_call_operand.hbm [shape: f32[8,4,32], index: 3, kind: output, shape index: {}]
  %s4 = sld [smem:[#allocation0]]
  $region38: #{tpu_custom_call.1} parent=0
    _
  %s6 = ssub.s32 1, %s4
  %s7 = scalar_select 0, %s6, %s4
  $region1: #{tpu_custom_call.1} parent=0
    #allocation3 [shape = 'u8[16384]{0}', space=vmem, size = 0x4000, scoped, tag = 'input window, operand 0, single buffered']
    #allocation4 [shape = 's32[1]{0}', space=sflag, size = 0x4, scoped, tag = 'scoped memory for tpu_custom_call.1']
    #allocation5 [shape = 's32[1]{0}', space=sflag, size = 0x4, scoped, tag = 'scoped memory for tpu_custom_call.1']
    #allocation6 [shape = 'u8[2048]{0}', space=vmem, size = 0x800, scoped, tag = 'input window, operand 1, single buffered']
    #allocation7 [shape = 's32[1]{0}', space=sflag, size = 0x4, scoped, tag = 'scoped memory for tpu_custom_call.1']
    #allocation8 [shape = 'u8[16384]{0}', space=vmem, size = 0x4000, scoped, tag = 'input window, operand 2, single buffered']
    #allocation9 [shape = 'u8[16384]{0}', space=vmem, size = 0x4000, scoped, tag = 'output window, operand 0, single buffered']
    %8 = vsyncpa [#allocation4], 0
    %9 = vsyncpa [#allocation7], 0
    %10 = vsyncpa [#allocation5], 0
    // Predicated region
    $region2: #{tpu_custom_call.1} parent=1 // pred_check
      _
    $region3: #{tpu_custom_call.1} parent=1 // pred_check_branch
      %12 = sbr.rel (0) target = $region5
    $region4: #{tpu_custom_call.1} parent=1 // pred_region
      %s14 = ssub.s32 512, 512
      %15 = vsyncadd [#allocation4], %s14
      %s16 = sshll.u32 [#allocation3], 4
      %s17 = int_to_ptr.vmem [resolvable:$true] %s16
      %22 = dma.hbm_to_vmem [thread:$0]  %s0, 512, %s17, [#allocation4], 64, 64, 4
    $region5: #{tpu_custom_call.1} parent=1 // pred_fallthru
      _
    // Predicated region
    $region6: #{tpu_custom_call.1} parent=1 // pred_check
      _
    $region7: #{tpu_custom_call.1} parent=1 // pred_check_branch
      %24 = sbr.rel (0) target = $region9
    $region8: #{tpu_custom_call.1} parent=1 // pred_region
      %s26 = ssub.s32 64, 64
      %27 = vsyncadd [#allocation7], %s26
      %s29 = sshll.u32 [#allocation6], 4
      %s30 = int_to_ptr.vmem [resolvable:$true] %s29
      %32 = dma.hbm_to_vmem [thread:$0]  %s1, 64, %s30, [#allocation7]
    $region9: #{tpu_custom_call.1} parent=1 // pred_fallthru
      _
    // Predicated region
    $region10: #{tpu_custom_call.1} parent=1 // pred_check
      _
    $region11: #{tpu_custom_call.1} parent=1 // pred_check_branch
      %34 = sbr.rel (0) target = $region13
    $region12: #{tpu_custom_call.1} parent=1 // pred_region
      %s36 = ssub.s32 512, 512
      %37 = vsyncadd [#allocation7], %s36
      %s38 = sshll.u32 [#allocation8], 4
      %s39 = int_to_ptr.vmem [resolvable:$true] %s38
      %44 = dma.hbm_to_vmem [thread:$0]  %s2, 512, %s39, [#allocation7], 128, 128, 8
    $region13: #{tpu_custom_call.1} parent=1 // pred_fallthru
      _
    // Predicated region
    $region14: #{tpu_custom_call.1} parent=1 // pred_check
      _
    $region15: #{tpu_custom_call.1} parent=1 // pred_check_branch
      %46 = sbr.rel (0) target = $region17
    $region16: #{tpu_custom_call.1} parent=1 // pred_region
      %47 = dma.done [#allocation4], 512
    $region17: #{tpu_custom_call.1} parent=1 // pred_fallthru
      _
    // Predicated region
    $region18: #{tpu_custom_call.1} parent=1 // pred_check
      _
    $region19: #{tpu_custom_call.1} parent=1 // pred_check_branch
      %49 = sbr.rel (0) target = $region21
    $region20: #{tpu_custom_call.1} parent=1 // pred_region
      %50 = dma.done [#allocation7], 64
    $region21: #{tpu_custom_call.1} parent=1 // pred_fallthru
      _
    // Predicated region
    $region22: #{tpu_custom_call.1} parent=1 // pred_check
      _
    $region23: #{tpu_custom_call.1} parent=1 // pred_check_branch
      %52 = sbr.rel (0) target = $region25
    $region24: #{tpu_custom_call.1} parent=1 // pred_region
      %53 = dma.done [#allocation7], 512
    $region25: #{tpu_custom_call.1} parent=1 // pred_fallthru
      _
    %p54 = scmp.eq.s32.totalorder 0, 0
    // Predicated region
    $region26: #{tpu_custom_call.1} parent=1 // pred_check
      %p55 = pneg %p54
    $region27: #{tpu_custom_call.1} parent=1 // pred_check_branch
      %57 = sbr.rel (%p55) target = $region29
    $region28: #{tpu_custom_call.1} parent=1 // pred_region
      %v58 = vld [vmem:[#allocation6] sm:$0xf]
      %vm59 = vcmask 257024
      %60 = vst.msk [vmem:[#allocation2] sm:$0xf] %vm59, %v58
    $region29: #{tpu_custom_call.1} parent=1 // pred_fallthru
      _
    %v61 = vld [vmem:[#allocation8] sm:$0xff]
    %v62 = vld [vmem:[#allocation8 + $0x8] sm:$0xff]
    %v63 = vld [vmem:[#allocation8 + $0x10] sm:$0xff]
    %v64 = vld [vmem:[#allocation8 + $0x18] sm:$0xff]
    %v65 = vld [vmem:[#allocation2] sm:$0xf]
    %v66 = vld [vmem:[#allocation3] sm:$0xf]
    %vm67 = vcmask 261120
    %v69 = vsel %vm67, %v65, 0
    %71 = vmatprep.subr.mxu0 0.0
    %72 = vmatpush1.msra.mxu0 %v61
    %73 = vmatprep.subr.mxu0 0.0
    %74 = vmatpush1.msra.mxu0 %v62
    %75 = vmatprep.subr.mxu0 0.0
    %76 = vmatpush1.msra.mxu0 %v63
    %77 = vmatprep.subr.mxu0 0.0
    %78 = vmatpush1.msra.mxu0 %v64
    %79 = vmatprep.subr.mxu0 0.0
    %80 = vmatpush1.msra.mxu0 0.0
    %81 = vmatprep.subr.mxu0 0.0
    %82 = vmatpush1.msra.mxu0 0.0
    %83 = vmatprep.subr.mxu0 0.0
    %84 = vmatpush1.msra.mxu0 0.0
    %85 = vmatprep.subr.mxu0 0.0
    %86 = vmatpush1.msra.mxu0 0.0
    %87 = vmatprep.subr.mxu0 0.0
    %88 = vmatpush1.msra.mxu0 0.0
    %89 = vmatprep.subr.mxu0 0.0
    %90 = vmatpush1.msra.mxu0 0.0
    %91 = vmatprep.subr.mxu0 0.0
    %92 = vmatpush1.msra.mxu0 0.0
    %93 = vmatprep.subr.mxu0 0.0
    %94 = vmatpush1.msra.mxu0 0.0
    %95 = vmatprep.subr.mxu0 0.0
    %96 = vmatpush1.msra.mxu0 0.0
    %97 = vmatprep.subr.mxu0 0.0
    %98 = vmatpush1.msra.mxu0 0.0
    %99 = vmatprep.subr.mxu0 0.0
    %100 = vmatpush1.msra.mxu0 0.0
    %101 = vmatprep.subr.mxu0 0.0
    %102 = vmatpush1.msra.mxu0 0.0
    %103 = vmatprep.subr.mxu0 0.0
    %104 = vmatpush1.msra.mxu0 0.0
    %105 = vmatprep.subr.mxu0 0.0
    %106 = vmatpush1.msra.mxu0 0.0
    %107 = vmatprep.subr.mxu0 0.0
    %108 = vmatpush1.msra.mxu0 0.0
    %109 = vmatprep.subr.mxu0 0.0
    %110 = vmatpush1.msra.mxu0 0.0
    %111 = vmatprep.subr.mxu0 0.0
    %112 = vmatpush1.msra.mxu0 0.0
    %113 = vmatprep.subr.mxu0 0.0
    %114 = vmatpush1.msra.mxu0 0.0
    %115 = vmatprep.subr.mxu0 0.0
    %116 = vmatpush1.msra.mxu0 0.0
    %117 = vmatprep.subr.mxu0 0.0
    %118 = vmatpush1.msra.mxu0 0.0
    %119 = vmatprep.subr.mxu0 0.0
    %120 = vmatpush1.msra.mxu0 0.0
    %121 = vmatprep.subr.mxu0 0.0
    %122 = vmatpush1.msra.mxu0 0.0
    %123 = vmatprep.subr.mxu0 0.0
    %124 = vmatpush1.msra.mxu0 0.0
    %125 = vmatprep.subr.mxu0 0.0
    %126 = vmatpush1.msra.mxu0 0.0
    %127 = vmatprep.subr.mxu0 0.0
    %128 = vmatpush1.msra.mxu0 0.0
    %129 = vmatprep.subr.mxu0 0.0
    %130 = vmatpush1.msra.mxu0 0.0
    %131 = vmatprep.subr.mxu0 0.0
    %132 = vmatpush1.msra.mxu0 0.0
    %133 = vmatprep.subr.mxu0 0.0
    %134 = vmatpush1.msra.mxu0 0.0
    %135 = vmatprep.mubr.f32.mxu0 0.0
    %136 = vmatmul.mubr.f32.gmra.mrb[0].mxu0 %v69
    %v137 = vpop.f32.mrb[0].mxu0
    %v138 = vadd.f32 %v66, %v137
    %v139 = vpop.f32.mrb[0].mxu0
    %140 = vdwg.mxu0
    %v141 = vmax.f32 %v138, 0.0
    %vm142 = vcmask 257024
    %143 = vst.msk [vmem:[#allocation9] sm:$0xf] %vm142, %v141
    %s144 = scalar_lea.vmem [#allocation3], 4
    %v145 = vld [vmem:[%s144] sm:$0xf]
    %v147 = vsel %vm67, %v141, 0
    %149 = vmatprep.subr.mxu0 0.0
    %150 = vmatpush1.msra.mxu0 %v61
    %151 = vmatprep.subr.mxu0 0.0
    %152 = vmatpush1.msra.mxu0 %v62
    %153 = vmatprep.subr.mxu0 0.0
    %154 = vmatpush1.msra.mxu0 %v63
    %155 = vmatprep.subr.mxu0 0.0
    %156 = vmatpush1.msra.mxu0 %v64
    %157 = vmatprep.subr.mxu0 0.0
    %158 = vmatpush1.msra.mxu0 0.0
    %159 = vmatprep.subr.mxu0 0.0
    %160 = vmatpush1.msra.mxu0 0.0
    %161 = vmatprep.subr.mxu0 0.0
    %162 = vmatpush1.msra.mxu0 0.0
    %163 = vmatprep.subr.mxu0 0.0
    %164 = vmatpush1.msra.mxu0 0.0
    %165 = vmatprep.subr.mxu0 0.0
    %166 = vmatpush1.msra.mxu0 0.0
    %167 = vmatprep.subr.mxu0 0.0
    %168 = vmatpush1.msra.mxu0 0.0
    %169 = vmatprep.subr.mxu0 0.0
    %170 = vmatpush1.msra.mxu0 0.0
    %171 = vmatprep.subr.mxu0 0.0
    %172 = vmatpush1.msra.mxu0 0.0
    %173 = vmatprep.subr.mxu0 0.0
    %174 = vmatpush1.msra.mxu0 0.0
    %175 = vmatprep.subr.mxu0 0.0
    %176 = vmatpush1.msra.mxu0 0.0
    %177 = vmatprep.subr.mxu0 0.0
    %178 = vmatpush1.msra.mxu0 0.0
    %179 = vmatprep.subr.mxu0 0.0
    %180 = vmatpush1.msra.mxu0 0.0
    %181 = vmatprep.subr.mxu0 0.0
    %182 = vmatpush1.msra.mxu0 0.0
    %183 = vmatprep.subr.mxu0 0.0
    %184 = vmatpush1.msra.mxu0 0.0
    %185 = vmatprep.subr.mxu0 0.0
    %186 = vmatpush1.msra.mxu0 0.0
    %187 = vmatprep.subr.mxu0 0.0
    %188 = vmatpush1.msra.mxu0 0.0
    %189 = vmatprep.subr.mxu0 0.0
    %190 = vmatpush1.msra.mxu0 0.0
    %191 = vmatprep.subr.mxu0 0.0
    %192 = vmatpush1.msra.mxu0 0.0
    %193 = vmatprep.subr.mxu0 0.0
    %194 = vmatpush1.msra.mxu0 0.0
    %195 = vmatprep.subr.mxu0 0.0
    %196 = vmatpush1.msra.mxu0 0.0
    %197 = vmatprep.subr.mxu0 0.0
    %198 = vmatpush1.msra.mxu0 0.0
    %199 = vmatprep.subr.mxu0 0.0
    %200 = vmatpush1.msra.mxu0 0.0
    %201 = vmatprep.subr.mxu0 0.0
    %202 = vmatpush1.msra.mxu0 0.0
    %203 = vmatprep.subr.mxu0 0.0
    %204 = vmatpush1.msra.mxu0 0.0
    %205 = vmatprep.subr.mxu0 0.0
    %206 = vmatpush1.msra.mxu0 0.0
    %207 = vmatprep.subr.mxu0 0.0
    %208 = vmatpush1.msra.mxu0 0.0
    %209 = vmatprep.subr.mxu0 0.0
    %210 = vmatpush1.msra.mxu0 0.0
    %211 = vmatprep.subr.mxu0 0.0
    %212 = vmatpush1.msra.mxu0 0.0
    %213 = vmatprep.mubr.f32.mxu0 0.0
    %214 = vmatmul.mubr.f32.gmra.mrb[0].mxu0 %v147
    %v215 = vpop.f32.mrb[0].mxu0
    %v216 = vadd.f32 %v145, %v215
    %v217 = vpop.f32.mrb[0].mxu0
    %218 = vdwg.mxu0
    %v219 = vmax.f32 %v216, 0.0
    %s220 = scalar_lea.vmem [#allocation9], 4
    %221 = vst.msk [vmem:[%s220] sm:$0xf] %vm142, %v219
    %s222 = scalar_lea.vmem [#allocation3], 8
    %v223 = vld [vmem:[%s222] sm:$0xf]
    %v225 = vsel %vm67, %v219, 0
    %227 = vmatprep.subr.mxu0 0.0
    %228 = vmatpush1.msra.mxu0 %v61
    %229 = vmatprep.subr.mxu0 0.0
    %230 = vmatpush1.msra.mxu0 %v62
    %231 = vmatprep.subr.mxu0 0.0
    %232 = vmatpush1.msra.mxu0 %v63
    %233 = vmatprep.subr.mxu0 0.0
    %234 = vmatpush1.msra.mxu0 %v64
    %235 = vmatprep.subr.mxu0 0.0
    %236 = vmatpush1.msra.mxu0 0.0
    %237 = vmatprep.subr.mxu0 0.0
    %238 = vmatpush1.msra.mxu0 0.0
    %239 = vmatprep.subr.mxu0 0.0
    %240 = vmatpush1.msra.mxu0 0.0
    %241 = vmatprep.subr.mxu0 0.0
    %242 = vmatpush1.msra.mxu0 0.0
    %243 = vmatprep.subr.mxu0 0.0
    %244 = vmatpush1.msra.mxu0 0.0
    %245 = vmatprep.subr.mxu0 0.0
    %246 = vmatpush1.msra.mxu0 0.0
    %247 = vmatprep.subr.mxu0 0.0
    %248 = vmatpush1.msra.mxu0 0.0
    %249 = vmatprep.subr.mxu0 0.0
    %250 = vmatpush1.msra.mxu0 0.0
    %251 = vmatprep.subr.mxu0 0.0
    %252 = vmatpush1.msra.mxu0 0.0
    %253 = vmatprep.subr.mxu0 0.0
    %254 = vmatpush1.msra.mxu0 0.0
    %255 = vmatprep.subr.mxu0 0.0
    %256 = vmatpush1.msra.mxu0 0.0
    %257 = vmatprep.subr.mxu0 0.0
    %258 = vmatpush1.msra.mxu0 0.0
    %259 = vmatprep.subr.mxu0 0.0
    %260 = vmatpush1.msra.mxu0 0.0
    %261 = vmatprep.subr.mxu0 0.0
    %262 = vmatpush1.msra.mxu0 0.0
    %263 = vmatprep.subr.mxu0 0.0
    %264 = vmatpush1.msra.mxu0 0.0
    %265 = vmatprep.subr.mxu0 0.0
    %266 = vmatpush1.msra.mxu0 0.0
    %267 = vmatprep.subr.mxu0 0.0
    %268 = vmatpush1.msra.mxu0 0.0
    %269 = vmatprep.subr.mxu0 0.0
    %270 = vmatpush1.msra.mxu0 0.0
    %271 = vmatprep.subr.mxu0 0.0
    %272 = vmatpush1.msra.mxu0 0.0
    %273 = vmatprep.subr.mxu0 0.0
    %274 = vmatpush1.msra.mxu0 0.0
    %275 = vmatprep.subr.mxu0 0.0
    %276 = vmatpush1.msra.mxu0 0.0
    %277 = vmatprep.subr.mxu0 0.0
    %278 = vmatpush1.msra.mxu0 0.0
    %279 = vmatprep.subr.mxu0 0.0
    %280 = vmatpush1.msra.mxu0 0.0
    %281 = vmatprep.subr.mxu0 0.0
    %282 = vmatpush1.msra.mxu0 0.0
    %283 = vmatprep.subr.mxu0 0.0
    %284 = vmatpush1.msra.mxu0 0.0
    %285 = vmatprep.subr.mxu0 0.0
    %286 = vmatpush1.msra.mxu0 0.0
    %287 = vmatprep.subr.mxu0 0.0
    %288 = vmatpush1.msra.mxu0 0.0
    %289 = vmatprep.subr.mxu0 0.0
    %290 = vmatpush1.msra.mxu0 0.0
    %291 = vmatprep.mubr.f32.mxu0 0.0
    %292 = vmatmul.mubr.f32.gmra.mrb[0].mxu0 %v225
    %v293 = vpop.f32.mrb[0].mxu0
    %v294 = vadd.f32 %v223, %v293
    %v295 = vpop.f32.mrb[0].mxu0
    %296 = vdwg.mxu0
    %v297 = vmax.f32 %v294, 0.0
    %s298 = scalar_lea.vmem [#allocation9], 8
    %299 = vst.msk [vmem:[%s298] sm:$0xf] %vm142, %v297
    %s300 = scalar_lea.vmem [#allocation3], 12
    %v301 = vld [vmem:[%s300] sm:$0xf]
    %v303 = vsel %vm67, %v297, 0
    %305 = vmatprep.subr.mxu0 0.0
    %306 = vmatpush1.msra.mxu0 %v61
    %307 = vmatprep.subr.mxu0 0.0
    %308 = vmatpush1.msra.mxu0 %v62
    %309 = vmatprep.subr.mxu0 0.0
    %310 = vmatpush1.msra.mxu0 %v63
    %311 = vmatprep.subr.mxu0 0.0
    %312 = vmatpush1.msra.mxu0 %v64
    %313 = vmatprep.subr.mxu0 0.0
    %314 = vmatpush1.msra.mxu0 0.0
    %315 = vmatprep.subr.mxu0 0.0
    %316 = vmatpush1.msra.mxu0 0.0
    %317 = vmatprep.subr.mxu0 0.0
    %318 = vmatpush1.msra.mxu0 0.0
    %319 = vmatprep.subr.mxu0 0.0
    %320 = vmatpush1.msra.mxu0 0.0
    %321 = vmatprep.subr.mxu0 0.0
    %322 = vmatpush1.msra.mxu0 0.0
    %323 = vmatprep.subr.mxu0 0.0
    %324 = vmatpush1.msra.mxu0 0.0
    %325 = vmatprep.subr.mxu0 0.0
    %326 = vmatpush1.msra.mxu0 0.0
    %327 = vmatprep.subr.mxu0 0.0
    %328 = vmatpush1.msra.mxu0 0.0
    %329 = vmatprep.subr.mxu0 0.0
    %330 = vmatpush1.msra.mxu0 0.0
    %331 = vmatprep.subr.mxu0 0.0
    %332 = vmatpush1.msra.mxu0 0.0
    %333 = vmatprep.subr.mxu0 0.0
    %334 = vmatpush1.msra.mxu0 0.0
    %335 = vmatprep.subr.mxu0 0.0
    %336 = vmatpush1.msra.mxu0 0.0
    %337 = vmatprep.subr.mxu0 0.0
    %338 = vmatpush1.msra.mxu0 0.0
    %339 = vmatprep.subr.mxu0 0.0
    %340 = vmatpush1.msra.mxu0 0.0
    %341 = vmatprep.subr.mxu0 0.0
    %342 = vmatpush1.msra.mxu0 0.0
    %343 = vmatprep.subr.mxu0 0.0
    %344 = vmatpush1.msra.mxu0 0.0
    %345 = vmatprep.subr.mxu0 0.0
    %346 = vmatpush1.msra.mxu0 0.0
    %347 = vmatprep.subr.mxu0 0.0
    %348 = vmatpush1.msra.mxu0 0.0
    %349 = vmatprep.subr.mxu0 0.0
    %350 = vmatpush1.msra.mxu0 0.0
    %351 = vmatprep.subr.mxu0 0.0
    %352 = vmatpush1.msra.mxu0 0.0
    %353 = vmatprep.subr.mxu0 0.0
    %354 = vmatpush1.msra.mxu0 0.0
    %355 = vmatprep.subr.mxu0 0.0
    %356 = vmatpush1.msra.mxu0 0.0
    %357 = vmatprep.subr.mxu0 0.0
    %358 = vmatpush1.msra.mxu0 0.0
    %359 = vmatprep.subr.mxu0 0.0
    %360 = vmatpush1.msra.mxu0 0.0
    %361 = vmatprep.subr.mxu0 0.0
    %362 = vmatpush1.msra.mxu0 0.0
    %363 = vmatprep.subr.mxu0 0.0
    %364 = vmatpush1.msra.mxu0 0.0
    %365 = vmatprep.subr.mxu0 0.0
    %366 = vmatpush1.msra.mxu0 0.0
    %367 = vmatprep.subr.mxu0 0.0
    %368 = vmatpush1.msra.mxu0 0.0
    %369 = vmatprep.mubr.f32.mxu0 0.0
    %370 = vmatmul.mubr.f32.gmra.mrb[0].mxu0 %v303
    %v371 = vpop.f32.mrb[0].mxu0
    %v372 = vadd.f32 %v301, %v371
    %v373 = vpop.f32.mrb[0].mxu0
    %374 = vdwg.mxu0
    %v375 = vmax.f32 %v372, 0.0
    %s376 = scalar_lea.vmem [#allocation9], 12
    %377 = vst.msk [vmem:[%s376] sm:$0xf] %vm142, %v375
    %s378 = scalar_lea.vmem [#allocation3], 16
    %v379 = vld [vmem:[%s378] sm:$0xf]
    %v381 = vsel %vm67, %v375, 0
    %383 = vmatprep.subr.mxu0 0.0
    %384 = vmatpush1.msra.mxu0 %v61
    %385 = vmatprep.subr.mxu0 0.0
    %386 = vmatpush1.msra.mxu0 %v62
    %387 = vmatprep.subr.mxu0 0.0
    %388 = vmatpush1.msra.mxu0 %v63
    %389 = vmatprep.subr.mxu0 0.0
    %390 = vmatpush1.msra.mxu0 %v64
    %391 = vmatprep.subr.mxu0 0.0
    %392 = vmatpush1.msra.mxu0 0.0
    %393 = vmatprep.subr.mxu0 0.0
    %394 = vmatpush1.msra.mxu0 0.0
    %395 = vmatprep.subr.mxu0 0.0
    %396 = vmatpush1.msra.mxu0 0.0
    %397 = vmatprep.subr.mxu0 0.0
    %398 = vmatpush1.msra.mxu0 0.0
    %399 = vmatprep.subr.mxu0 0.0
    %400 = vmatpush1.msra.mxu0 0.0
    %401 = vmatprep.subr.mxu0 0.0
    %402 = vmatpush1.msra.mxu0 0.0
    %403 = vmatprep.subr.mxu0 0.0
    %404 = vmatpush1.msra.mxu0 0.0
    %405 = vmatprep.subr.mxu0 0.0
    %406 = vmatpush1.msra.mxu0 0.0
    %407 = vmatprep.subr.mxu0 0.0
    %408 = vmatpush1.msra.mxu0 0.0
    %409 = vmatprep.subr.mxu0 0.0
    %410 = vmatpush1.msra.mxu0 0.0
    %411 = vmatprep.subr.mxu0 0.0
    %412 = vmatpush1.msra.mxu0 0.0
    %413 = vmatprep.subr.mxu0 0.0
    %414 = vmatpush1.msra.mxu0 0.0
    %415 = vmatprep.subr.mxu0 0.0
    %416 = vmatpush1.msra.mxu0 0.0
    %417 = vmatprep.subr.mxu0 0.0
    %418 = vmatpush1.msra.mxu0 0.0
    %419 = vmatprep.subr.mxu0 0.0
    %420 = vmatpush1.msra.mxu0 0.0
    %421 = vmatprep.subr.mxu0 0.0
    %422 = vmatpush1.msra.mxu0 0.0
    %423 = vmatprep.subr.mxu0 0.0
    %424 = vmatpush1.msra.mxu0 0.0
    %425 = vmatprep.subr.mxu0 0.0
    %426 = vmatpush1.msra.mxu0 0.0
    %427 = vmatprep.subr.mxu0 0.0
    %428 = vmatpush1.msra.mxu0 0.0
    %429 = vmatprep.subr.mxu0 0.0
    %430 = vmatpush1.msra.mxu0 0.0
    %431 = vmatprep.subr.mxu0 0.0
    %432 = vmatpush1.msra.mxu0 0.0
    %433 = vmatprep.subr.mxu0 0.0
    %434 = vmatpush1.msra.mxu0 0.0
    %435 = vmatprep.subr.mxu0 0.0
    %436 = vmatpush1.msra.mxu0 0.0
    %437 = vmatprep.subr.mxu0 0.0
    %438 = vmatpush1.msra.mxu0 0.0
    %439 = vmatprep.subr.mxu0 0.0
    %440 = vmatpush1.msra.mxu0 0.0
    %441 = vmatprep.subr.mxu0 0.0
    %442 = vmatpush1.msra.mxu0 0.0
    %443 = vmatprep.subr.mxu0 0.0
    %444 = vmatpush1.msra.mxu0 0.0
    %445 = vmatprep.subr.mxu0 0.0
    %446 = vmatpush1.msra.mxu0 0.0
    %447 = vmatprep.mubr.f32.mxu0 0.0
    %448 = vmatmul.mubr.f32.gmra.mrb[0].mxu0 %v381
    %v449 = vpop.f32.mrb[0].mxu0
    %v450 = vadd.f32 %v379, %v449
    %v451 = vpop.f32.mrb[0].mxu0
    %452 = vdwg.mxu0
    %v453 = vmax.f32 %v450, 0.0
    %s454 = scalar_lea.vmem [#allocation9], 16
    %455 = vst.msk [vmem:[%s454] sm:$0xf] %vm142, %v453
    %s456 = scalar_lea.vmem [#allocation3], 20
    %v457 = vld [vmem:[%s456] sm:$0xf]
    %v459 = vsel %vm67, %v453, 0
    %461 = vmatprep.subr.mxu0 0.0
    %462 = vmatpush1.msra.mxu0 %v61
    %463 = vmatprep.subr.mxu0 0.0
    %464 = vmatpush1.msra.mxu0 %v62
    %465 = vmatprep.subr.mxu0 0.0
    %466 = vmatpush1.msra.mxu0 %v63
    %467 = vmatprep.subr.mxu0 0.0
    %468 = vmatpush1.msra.mxu0 %v64
    %469 = vmatprep.subr.mxu0 0.0
    %470 = vmatpush1.msra.mxu0 0.0
    %471 = vmatprep.subr.mxu0 0.0
    %472 = vmatpush1.msra.mxu0 0.0
    %473 = vmatprep.subr.mxu0 0.0
    %474 = vmatpush1.msra.mxu0 0.0
    %475 = vmatprep.subr.mxu0 0.0
    %476 = vmatpush1.msra.mxu0 0.0
    %477 = vmatprep.subr.mxu0 0.0
    %478 = vmatpush1.msra.mxu0 0.0
    %479 = vmatprep.subr.mxu0 0.0
    %480 = vmatpush1.msra.mxu0 0.0
    %481 = vmatprep.subr.mxu0 0.0
    %482 = vmatpush1.msra.mxu0 0.0
    %483 = vmatprep.subr.mxu0 0.0
    %484 = vmatpush1.msra.mxu0 0.0
    %485 = vmatprep.subr.mxu0 0.0
    %486 = vmatpush1.msra.mxu0 0.0
    %487 = vmatprep.subr.mxu0 0.0
    %488 = vmatpush1.msra.mxu0 0.0
    %489 = vmatprep.subr.mxu0 0.0
    %490 = vmatpush1.msra.mxu0 0.0
    %491 = vmatprep.subr.mxu0 0.0
    %492 = vmatpush1.msra.mxu0 0.0
    %493 = vmatprep.subr.mxu0 0.0
    %494 = vmatpush1.msra.mxu0 0.0
    %495 = vmatprep.subr.mxu0 0.0
    %496 = vmatpush1.msra.mxu0 0.0
    %497 = vmatprep.subr.mxu0 0.0
    %498 = vmatpush1.msra.mxu0 0.0
    %499 = vmatprep.subr.mxu0 0.0
    %500 = vmatpush1.msra.mxu0 0.0
    %501 = vmatprep.subr.mxu0 0.0
    %502 = vmatpush1.msra.mxu0 0.0
    %503 = vmatprep.subr.mxu0 0.0
    %504 = vmatpush1.msra.mxu0 0.0
    %505 = vmatprep.subr.mxu0 0.0
    %506 = vmatpush1.msra.mxu0 0.0
    %507 = vmatprep.subr.mxu0 0.0
    %508 = vmatpush1.msra.mxu0 0.0
    %509 = vmatprep.subr.mxu0 0.0
    %510 = vmatpush1.msra.mxu0 0.0
    %511 = vmatprep.subr.mxu0 0.0
    %512 = vmatpush1.msra.mxu0 0.0
    %513 = vmatprep.subr.mxu0 0.0
    %514 = vmatpush1.msra.mxu0 0.0
    %515 = vmatprep.subr.mxu0 0.0
    %516 = vmatpush1.msra.mxu0 0.0
    %517 = vmatprep.subr.mxu0 0.0
    %518 = vmatpush1.msra.mxu0 0.0
    %519 = vmatprep.subr.mxu0 0.0
    %520 = vmatpush1.msra.mxu0 0.0
    %521 = vmatprep.subr.mxu0 0.0
    %522 = vmatpush1.msra.mxu0 0.0
    %523 = vmatprep.subr.mxu0 0.0
    %524 = vmatpush1.msra.mxu0 0.0
    %525 = vmatprep.mubr.f32.mxu0 0.0
    %526 = vmatmul.mubr.f32.gmra.mrb[0].mxu0 %v459
    %v527 = vpop.f32.mrb[0].mxu0
    %v528 = vadd.f32 %v457, %v527
    %v529 = vpop.f32.mrb[0].mxu0
    %530 = vdwg.mxu0
    %v531 = vmax.f32 %v528, 0.0
    %s532 = scalar_lea.vmem [#allocation9], 20
    %533 = vst.msk [vmem:[%s532] sm:$0xf] %vm142, %v531
    %s534 = scalar_lea.vmem [#allocation3], 24
    %v535 = vld [vmem:[%s534] sm:$0xf]
    %v537 = vsel %vm67, %v531, 0
    %539 = vmatprep.subr.mxu0 0.0
    %540 = vmatpush1.msra.mxu0 %v61
    %541 = vmatprep.subr.mxu0 0.0
    %542 = vmatpush1.msra.mxu0 %v62
    %543 = vmatprep.subr.mxu0 0.0
    %544 = vmatpush1.msra.mxu0 %v63
    %545 = vmatprep.subr.mxu0 0.0
    %546 = vmatpush1.msra.mxu0 %v64
    %547 = vmatprep.subr.mxu0 0.0
    %548 = vmatpush1.msra.mxu0 0.0
    %549 = vmatprep.subr.mxu0 0.0
    %550 = vmatpush1.msra.mxu0 0.0
    %551 = vmatprep.subr.mxu0 0.0
    %552 = vmatpush1.msra.mxu0 0.0
    %553 = vmatprep.subr.mxu0 0.0
    %554 = vmatpush1.msra.mxu0 0.0
    %555 = vmatprep.subr.mxu0 0.0
    %556 = vmatpush1.msra.mxu0 0.0
    %557 = vmatprep.subr.mxu0 0.0
    %558 = vmatpush1.msra.mxu0 0.0
    %559 = vmatprep.subr.mxu0 0.0
    %560 = vmatpush1.msra.mxu0 0.0
    %561 = vmatprep.subr.mxu0 0.0
    %562 = vmatpush1.msra.mxu0 0.0
    %563 = vmatprep.subr.mxu0 0.0
    %564 = vmatpush1.msra.mxu0 0.0
    %565 = vmatprep.subr.mxu0 0.0
    %566 = vmatpush1.msra.mxu0 0.0
    %567 = vmatprep.subr.mxu0 0.0
    %568 = vmatpush1.msra.mxu0 0.0
    %569 = vmatprep.subr.mxu0 0.0
    %570 = vmatpush1.msra.mxu0 0.0
    %571 = vmatprep.subr.mxu0 0.0
    %572 = vmatpush1.msra.mxu0 0.0
    %573 = vmatprep.subr.mxu0 0.0
    %574 = vmatpush1.msra.mxu0 0.0
    %575 = vmatprep.subr.mxu0 0.0
    %576 = vmatpush1.msra.mxu0 0.0
    %577 = vmatprep.subr.mxu0 0.0
    %578 = vmatpush1.msra.mxu0 0.0
    %579 = vmatprep.subr.mxu0 0.0
    %580 = vmatpush1.msra.mxu0 0.0
    %581 = vmatprep.subr.mxu0 0.0
    %582 = vmatpush1.msra.mxu0 0.0
    %583 = vmatprep.subr.mxu0 0.0
    %584 = vmatpush1.msra.mxu0 0.0
    %585 = vmatprep.subr.mxu0 0.0
    %586 = vmatpush1.msra.mxu0 0.0
    %587 = vmatprep.subr.mxu0 0.0
    %588 = vmatpush1.msra.mxu0 0.0
    %589 = vmatprep.subr.mxu0 0.0
    %590 = vmatpush1.msra.mxu0 0.0
    %591 = vmatprep.subr.mxu0 0.0
    %592 = vmatpush1.msra.mxu0 0.0
    %593 = vmatprep.subr.mxu0 0.0
    %594 = vmatpush1.msra.mxu0 0.0
    %595 = vmatprep.subr.mxu0 0.0
    %596 = vmatpush1.msra.mxu0 0.0
    %597 = vmatprep.subr.mxu0 0.0
    %598 = vmatpush1.msra.mxu0 0.0
    %599 = vmatprep.subr.mxu0 0.0
    %600 = vmatpush1.msra.mxu0 0.0
    %601 = vmatprep.subr.mxu0 0.0
    %602 = vmatpush1.msra.mxu0 0.0
    %603 = vmatprep.mubr.f32.mxu0 0.0
    %604 = vmatmul.mubr.f32.gmra.mrb[0].mxu0 %v537
    %v605 = vpop.f32.mrb[0].mxu0
    %v606 = vadd.f32 %v535, %v605
    %v607 = vpop.f32.mrb[0].mxu0
    %608 = vdwg.mxu0
    %v609 = vmax.f32 %v606, 0.0
    %s610 = scalar_lea.vmem [#allocation9], 24
    %611 = vst.msk [vmem:[%s610] sm:$0xf] %vm142, %v609
    %s612 = scalar_lea.vmem [#allocation3], 28
    %v613 = vld [vmem:[%s612] sm:$0xf]
    %v615 = vsel %vm67, %v609, 0
    %617 = vmatprep.subr.mxu0 0.0
    %618 = vmatpush1.msra.mxu0 %v61
    %619 = vmatprep.subr.mxu0 0.0
    %620 = vmatpush1.msra.mxu0 %v62
    %621 = vmatprep.subr.mxu0 0.0
    %622 = vmatpush1.msra.mxu0 %v63
    %623 = vmatprep.subr.mxu0 0.0
    %624 = vmatpush1.msra.mxu0 %v64
    %625 = vmatprep.subr.mxu0 0.0
    %626 = vmatpush1.msra.mxu0 0.0
    %627 = vmatprep.subr.mxu0 0.0
    %628 = vmatpush1.msra.mxu0 0.0
    %629 = vmatprep.subr.mxu0 0.0
    %630 = vmatpush1.msra.mxu0 0.0
    %631 = vmatprep.subr.mxu0 0.0
    %632 = vmatpush1.msra.mxu0 0.0
    %633 = vmatprep.subr.mxu0 0.0
    %634 = vmatpush1.msra.mxu0 0.0
    %635 = vmatprep.subr.mxu0 0.0
    %636 = vmatpush1.msra.mxu0 0.0
    %637 = vmatprep.subr.mxu0 0.0
    %638 = vmatpush1.msra.mxu0 0.0
    %639 = vmatprep.subr.mxu0 0.0
    %640 = vmatpush1.msra.mxu0 0.0
    %641 = vmatprep.subr.mxu0 0.0
    %642 = vmatpush1.msra.mxu0 0.0
    %643 = vmatprep.subr.mxu0 0.0
    %644 = vmatpush1.msra.mxu0 0.0
    %645 = vmatprep.subr.mxu0 0.0
    %646 = vmatpush1.msra.mxu0 0.0
    %647 = vmatprep.subr.mxu0 0.0
    %648 = vmatpush1.msra.mxu0 0.0
    %649 = vmatprep.subr.mxu0 0.0
    %650 = vmatpush1.msra.mxu0 0.0
    %651 = vmatprep.subr.mxu0 0.0
    %652 = vmatpush1.msra.mxu0 0.0
    %653 = vmatprep.subr.mxu0 0.0
    %654 = vmatpush1.msra.mxu0 0.0
    %655 = vmatprep.subr.mxu0 0.0
    %656 = vmatpush1.msra.mxu0 0.0
    %657 = vmatprep.subr.mxu0 0.0
    %658 = vmatpush1.msra.mxu0 0.0
    %659 = vmatprep.subr.mxu0 0.0
    %660 = vmatpush1.msra.mxu0 0.0
    %661 = vmatprep.subr.mxu0 0.0
    %662 = vmatpush1.msra.mxu0 0.0
    %663 = vmatprep.subr.mxu0 0.0
    %664 = vmatpush1.msra.mxu0 0.0
    %665 = vmatprep.subr.mxu0 0.0
    %666 = vmatpush1.msra.mxu0 0.0
    %667 = vmatprep.subr.mxu0 0.0
    %668 = vmatpush1.msra.mxu0 0.0
    %669 = vmatprep.subr.mxu0 0.0
    %670 = vmatpush1.msra.mxu0 0.0
    %671 = vmatprep.subr.mxu0 0.0
    %672 = vmatpush1.msra.mxu0 0.0
    %673 = vmatprep.subr.mxu0 0.0
    %674 = vmatpush1.msra.mxu0 0.0
    %675 = vmatprep.subr.mxu0 0.0
    %676 = vmatpush1.msra.mxu0 0.0
    %677 = vmatprep.subr.mxu0 0.0
    %678 = vmatpush1.msra.mxu0 0.0
    %679 = vmatprep.subr.mxu0 0.0
    %680 = vmatpush1.msra.mxu0 0.0
    %681 = vmatprep.mubr.f32.mxu0 0.0
    %682 = vmatmul.mubr.f32.gmra.mrb[0].mxu0 %v615
    %v683 = vpop.f32.mrb[0].mxu0
    %v684 = vadd.f32 %v613, %v683
    %v685 = vpop.f32.mrb[0].mxu0
    %686 = vdwg.mxu0
    %v687 = vmax.f32 %v684, 0.0
    %s688 = scalar_lea.vmem [#allocation9], 28
    %689 = vst.msk [vmem:[%s688] sm:$0xf] %vm142, %v687
    %690 = vst.msk [vmem:[#allocation2] sm:$0xf] %vm142, %v687
    // Predicated region
    $region30: #{tpu_custom_call.1} parent=1 // pred_check
      _
    $region31: #{tpu_custom_call.1} parent=1 // pred_check_branch
      %692 = sbr.rel (0) target = $region33
    $region32: #{tpu_custom_call.1} parent=1 // pred_region
      %s694 = ssub.s32 512, 512
      %695 = vsyncadd [#allocation5], %s694
      %s696 = sshll.u32 [#allocation9], 4
      %s697 = int_to_ptr.vmem [resolvable:$true] %s696
      %702 = dma.vmem_to_hbm [thread:$0]  %s697, 512, %s3, [#allocation5], 64, 64, 4
    $region33: #{tpu_custom_call.1} parent=1 // pred_fallthru
      _
    // Predicated region
    $region34: #{tpu_custom_call.1} parent=1 // pred_check
      _
    $region35: #{tpu_custom_call.1} parent=1 // pred_check_branch
      %704 = sbr.rel (0) target = $region37
    $region36: #{tpu_custom_call.1} parent=1 // pred_region
      %705 = dma.done [#allocation5], 512
    $region37: #{tpu_custom_call.1} parent=1 // pred_fallthru
      _
    %706 = vsyncpa [#allocation4], 1
    %707 = vsyncpa [#allocation7], 1
    %708 = vsyncpa [#allocation5], 1

</llo_original>
